<compile_context>
chip_gen: v6e
topology: v6e:2x2x1
jax: 0.10.0
libtpu: 0.0.40
codegen_flags: <defaults>
</compile_context>

<pallas_src>
import functools

import jax
import jax.numpy as jnp
from jax.experimental import pallas as pl
from jax.experimental.pallas import tpu as pltpu


def _build_pe(d_model: int, max_len: int = 1000) -> jnp.ndarray:
    """Deterministic sinusoidal table, identical to the PyTorch __init__."""
    position = jnp.arange(max_len, dtype=jnp.float32)[:, None]            # (max_len, 1)
    div_term = jnp.exp(
        jnp.arange(0, d_model, 2, dtype=jnp.float32)
        * -(jnp.log(10000.0) / d_model)
    )                                                                      # (d_model//2,)
    ang = position * div_term                                              # (max_len, d_model//2)
    pe = jnp.zeros((max_len, 1, d_model), dtype=jnp.float32)
    pe = pe.at[:, 0, 0::2].set(jnp.sin(ang))
    pe = pe.at[:, 0, 1::2].set(jnp.cos(ang))
    return pe


# ----------------------------- kernel -------------------------------

def _pos_enc_kernel(x_ref, pe_ref, o_ref):
    # x_ref / o_ref: (ts, B, D); pe_ref: (ts, D) f32.
    # Add in f32 (matches the fp32 pe buffer of the reference module), broadcast pe
    # over the batch (sublane) axis, cast once at the store.
    x = x_ref[...].astype(jnp.float32)
    pe = pe_ref[...][:, None, :]                     # (ts, 1, D), sublane broadcast
    o_ref[...] = (x + pe).astype(o_ref.dtype)


# --------------------------- tile picking ---------------------------

def _cdiv(a: int, b: int) -> int:
    return -(-a // b)


def _vmem_budget_and_limit() -> tuple[int, int]:
    """Generation-aware VMEM working-set budget and scoped-VMEM limit."""
    try:
        cap = int(pltpu.get_tpu_info().vmem_capacity_bytes)
    except Exception:
        cap = 64 << 20                      # conservative: v7x per-TensorCore VMEM
    # leave headroom for compiler scratch; v7x: 48 MiB limit / 40 MiB budget,
    # v5e/v6e (128 MiB): 96 MiB limit / 48 MiB budget.
    limit = max(32 << 20, min(cap - (16 << 20), 96 << 20))
    budget = max(8 << 20, min(limit - (8 << 20), 48 << 20))
    return budget, limit


def _pick_seq_tile(S: int, per_row_bytes: int, budget: int) -> int:
    """Largest seq tile that fits the VMEM budget, with >= 2 grid steps for large S."""
    if S <= 16:
        return S
    steps = _cdiv(S * per_row_bytes, max(per_row_bytes, budget) if budget <= 0 else budget)
    steps = max(steps, 1)
    if S >= 32:
        steps = max(steps, 2)               # keep both v7x TensorCores busy
    ts = _cdiv(S, steps)
    ts = ((ts + 7) // 8) * 8                # pe BlockSpec rows must be a multiple of 8
    if ts >= S:
        return S                            # single block: pe block == full extent (legal)
    return ts


# ----------------------------- wrapper ------------------------------

@jax.jit
def positional_encoding(x: jnp.ndarray, pe: jnp.ndarray) -> jnp.ndarray:
    """x: (S, B, D); pe: (max_len, 1, D) f32 table. Returns x + pe[:S]."""
    S, B, D = x.shape
    max_len = pe.shape[0]
    if S > max_len:
        raise ValueError(f"sequence length {S} exceeds pe table max_len {max_len}")

    # Tiny (S, D) f32 row table; avoids the 8x sublane-padded DMA of a (ts, 1, D) block.
    pe2 = pe[:S, 0, :].astype(jnp.float32)

    itemsize = jnp.dtype(x.dtype).itemsize
    # Per seq row: double-buffered x-in + out tiles, double-buffered pe rows,
    # plus one f32 compute-temp margin.
    per_row_bytes = 4 * B * D * itemsize + 2 * D * 4 + B * D * 4

    budget, vmem_limit = _vmem_budget_and_limit()
    ts = _pick_seq_tile(S, per_row_bytes, budget)
    grid = (_cdiv(S, ts),)                  # ragged last block is fine (masked writes)

    cost = pl.CostEstimate(
        flops=S * B * D,
        transcendentals=0,
        bytes_accessed=2 * S * B * D * itemsize + S * D * 4,
    )

    return pl.pallas_call(
        _pos_enc_kernel,
        out_shape=jax.ShapeDtypeStruct((S, B, D), x.dtype),
        grid_spec=pltpu.PrefetchScalarGridSpec(
            num_scalar_prefetch=0,
            grid=grid,
            in_specs=[
                pl.BlockSpec((ts, B, D), lambda i: (i, 0, 0)),   # B, D full extents
                pl.BlockSpec((ts, D), lambda i: (i, 0)),         # 2-D pe rows
            ],
            out_specs=pl.BlockSpec((ts, B, D), lambda i: (i, 0, 0)),
        ),
        compiler_params=pltpu.CompilerParams(
            dimension_semantics=("parallel",),
            vmem_limit_bytes=vmem_limit,
        ),
        cost_estimate=cost,
    )(x, pe2)


if __name__ == "__main__":
    MAX_LEN = 1000
    key = jax.random.PRNGKey(0)
    k1, k2, k3 = jax.random.split(key, 3)

    # Small shapes consistent with the module's forward (seq, batch, d_model).
    S, B, D = 8, 2, 32
    x = jax.random.normal(k1, (S, B, D), dtype=jnp.float32)
    pe = _build_pe(D, MAX_LEN)
    out = jax.block_until_ready(positional_encoding(x, pe))
    ref = x + pe[:S]
    assert out.shape == (S, B, D)
    assert jnp.allclose(out, ref, atol=1e-6), "f32 mismatch vs reference"

    # Multi-step grid with a ragged last block (S not a multiple of the chosen tile).
    S3, B3, D3 = 40, 2, 32
    x3 = jax.random.normal(k3, (S3, B3, D3), dtype=jnp.float32)
    out3 = jax.block_until_ready(positional_encoding(x3, pe))
    ref3 = x3 + pe[:S3]
    assert out3.shape == (S3, B3, D3)
    assert jnp.allclose(out3, ref3, atol=1e-6), "ragged-grid f32 mismatch vs reference"

    # bf16 activations on lane/sublane-aligned shapes; add is done in f32 in-kernel.
    S2, B2, D2 = 16, 8, 128
    pe_big = _build_pe(D2, MAX_LEN)
    x_bf = jax.random.normal(k2, (S2, B2, D2), dtype=jnp.float32).astype(jnp.bfloat16)
    out_bf = jax.block_until_ready(positional_encoding(x_bf, pe_big))
    ref_bf = (x_bf.astype(jnp.float32) + pe_big[:S2]).astype(jnp.bfloat16)
    assert out_bf.shape == (S2, B2, D2)
    assert jnp.allclose(out_bf.astype(jnp.float32), ref_bf.astype(jnp.float32),
                        atol=2e-2, rtol=2e-2), "bf16 mismatch vs reference"

    print("KERNEL_OK")
</pallas_src>

<mosaic_0001>
module attributes {stable_mosaic.version = 11 : i64} {
  func.func @_pos_enc_kernel(%arg0: i32, %arg1: memref<8x2x32xf32, #tpu.memory_space<vmem>>, %arg2: memref<8x32xf32, #tpu.memory_space<vmem>>, %arg3: memref<8x2x32xf32, #tpu.memory_space<vmem>>) attributes {dimension_semantics = [#tpu.dimension_semantics<parallel>], iteration_bounds = array<i64: 1>, scalar_prefetch = 0 : i64, scratch_operands = 0 : i64, tpu.core_type = #tpu.core_type<tc>, window_params = [{transform_indices = @transform_0, window_bounds = array<i64: 8, 2, 32>}, {transform_indices = @transform_1, window_bounds = array<i64: 8, 32>}, {transform_indices = @transform_2, window_bounds = array<i64: 8, 2, 32>}]} {
    %c0 = arith.constant 0 : index
    %c0_0 = arith.constant 0 : index
    %c0_1 = arith.constant 0 : index
    %0 = vector.load %arg1[%c0, %c0_0, %c0_1] : memref<8x2x32xf32, #tpu.memory_space<vmem>>, vector<8x2x32xf32>
    %c0_2 = arith.constant 0 : index
    %c0_3 = arith.constant 0 : index
    %1 = vector.load %arg2[%c0_2, %c0_3] : memref<8x32xf32, #tpu.memory_space<vmem>>, vector<8x32xf32>
    %2 = vector.shape_cast %1 : vector<8x32xf32> to vector<8x1x32xf32>
    %3 = vector.broadcast %2 : vector<8x1x32xf32> to vector<8x2x32xf32>
    %4 = arith.addf %0, %3 : vector<8x2x32xf32>
    %c0_4 = arith.constant 0 : index
    %c0_5 = arith.constant 0 : index
    %c0_6 = arith.constant 0 : index
    %5 = vector.load %arg3[%c0_4, %c0_5, %c0_6] : memref<8x2x32xf32, #tpu.memory_space<vmem>>, vector<8x2x32xf32>
    tpu.vector_store %arg3[%c0_4, %c0_5, %c0_6], %4 {strides = array<i32>} : memref<8x2x32xf32, #tpu.memory_space<vmem>>, vector<8x2x32xf32>,
    return
  }
  func.func @transform_0(%arg0: i32) -> (i32, i32, i32) {
    %c0_i32 = arith.constant 0 : i32
    %c0_i32_0 = arith.constant 0 : i32
    %c0_i32_1 = arith.constant 0 : i32
    return %arg0, %c0_i32, %c0_i32_0 : i32, i32, i32
  }
  func.func @transform_1(%arg0: i32) -> (i32, i32) {
    %c0_i32 = arith.constant 0 : i32
    %c0_i32_0 = arith.constant 0 : i32
    return %arg0, %c0_i32 : i32, i32
  }
  func.func @transform_2(%arg0: i32) -> (i32, i32, i32) {
    %c0_i32 = arith.constant 0 : i32
    %c0_i32_0 = arith.constant 0 : i32
    %c0_i32_1 = arith.constant 0 : i32
    return %arg0, %c0_i32, %c0_i32_0 : i32, i32, i32
  }
}

</mosaic_0001>

<llo_original>
// kernel: positional_encoding.1
$region0: #{positional_encoding.1}
  #allocation0 [shape = 'u32[]', space=smem, size = 0x4, offset = 0x4, fixed_abs, tag = 'smem constant byte address 0x4 - core index']
  #allocation1 [shape = 'u32[144,128]{1,0:T(1,128)}', space=vmem, size = 0x12000, scoped, tag = 'internal scratch']
  %s0 = inlined_call_operand.vmem [shape: f32[8,2,32], index: 0, kind: input, shape index: {}]
  %s1 = inlined_call_operand.vmem [shape: f32[8,32], index: 1, kind: input, shape index: {}]
  %s2 = inlined_call_operand.hbm [shape: f32[8,2,32], index: 2, kind: output, shape index: {}]
  %s3 = sld [smem:[#allocation0]]
  $region18: #{positional_encoding.1} parent=0
    _
  %s5 = ssub.s32 1, %s3
  %s6 = scalar_select 0, %s5, %s3
  $region1: #{positional_encoding.1} parent=0
    #allocation2 [shape = 'u8[8192]{0}', space=vmem, size = 0x2000, scoped, tag = 'output window, operand 0, single buffered']
    #allocation3 [shape = 's32[1]{0}', space=sflag, size = 0x4, scoped, tag = 'scoped memory for positional_encoding.1']
    %7 = vsyncpa [#allocation3], 0
    // Predicated region
    $region2: #{positional_encoding.1} parent=1 // pred_check
      _
    $region3: #{positional_encoding.1} parent=1 // pred_check_branch
      %9 = sbr.rel (0) target = $region5
    $region4: #{positional_encoding.1} parent=1 // pred_region
      _
    $region5: #{positional_encoding.1} parent=1 // pred_fallthru
      _
    // Predicated region
    $region6: #{positional_encoding.1} parent=1 // pred_check
      _
    $region7: #{positional_encoding.1} parent=1 // pred_check_branch
      %11 = sbr.rel (0) target = $region9
    $region8: #{positional_encoding.1} parent=1 // pred_region
      _
    $region9: #{positional_encoding.1} parent=1 // pred_fallthru
      _
    %v12 = vld [vmem:[%s0] sm:$0x3]
    %v13 = vld [vmem:[%s0 + $0x2] sm:$0x3]
    %v14 = vld [vmem:[%s0 + $0x4] sm:$0x3]
    %v15 = vld [vmem:[%s0 + $0x6] sm:$0x3]
    %v16 = vld [vmem:[%s0 + $0x8] sm:$0x3]
    %v17 = vld [vmem:[%s0 + $0xa] sm:$0x3]
    %v18 = vld [vmem:[%s0 + $0xc] sm:$0x3]
    %v19 = vld [vmem:[%s0 + $0xe] sm:$0x3]
    %v20 = vld [vmem:[%s1] sm:$0xff]
    %v22 = vcombine.high %v20, %v20
    %v24 = vunpack.c.l.s4 1966171168
    %v25 = vunpack.c.0.s8 %v24
    %v26 = vlaneseq
    %v27 = vshrl.u32 %v26, 7
    %v28 = vsub.s32 %v25, %v27
    %v29 = vrot.slane %v20, %v28
    %v31 = vunpack.c.l.s4 1966171168
    %v32 = vunpack.c.0.s8 %v31
    %v33 = vlaneseq
    %v34 = vshrl.u32 %v33, 7
    %v35 = vsub.s32 %v32, %v34
    %v36 = vrot.slane %v22, %v35
    %v37 = vcombine.high %v29, %v29
    %v38 = vcombine.high %v36, %v36
    %v40 = vunpack.c.l.s4 1966171168
    %v41 = vunpack.c.0.s8 %v40
    %v42 = vlaneseq
    %v43 = vshrl.u32 %v42, 7
    %v44 = vsub.s32 %v41, %v43
    %v45 = vrot.slane %v29, %v44
    %v47 = vunpack.c.l.s4 1966171168
    %v48 = vunpack.c.0.s8 %v47
    %v49 = vlaneseq
    %v50 = vshrl.u32 %v49, 7
    %v51 = vsub.s32 %v48, %v50
    %v52 = vrot.slane %v36, %v51
    %v54 = vunpack.c.l.s4 1966171168
    %v55 = vunpack.c.0.s8 %v54
    %v56 = vlaneseq
    %v57 = vshrl.u32 %v56, 7
    %v58 = vsub.s32 %v55, %v57
    %v59 = vrot.slane %v37, %v58
    %v61 = vunpack.c.l.s4 1966171168
    %v62 = vunpack.c.0.s8 %v61
    %v63 = vlaneseq
    %v64 = vshrl.u32 %v63, 7
    %v65 = vsub.s32 %v62, %v64
    %v66 = vrot.slane %v38, %v65
    %v67 = vcombine.high %v45, %v45
    %v68 = vcombine.high %v52, %v52
    %v69 = vcombine.high %v59, %v59
    %v70 = vcombine.high %v66, %v66
    %v71 = vlaneseq
    %v72 = vshrl.u32 %v71, 7
    %v73 = vsub.s32 0, %v72
    %v74 = vrot.slane %v45, %v73
    %v75 = vlaneseq
    %v76 = vshrl.u32 %v75, 7
    %v77 = vsub.s32 0, %v76
    %v78 = vrot.slane %v59, %v77
    %v79 = vlaneseq
    %v80 = vshrl.u32 %v79, 7
    %v81 = vsub.s32 0, %v80
    %v82 = vrot.slane %v67, %v81
    %v83 = vlaneseq
    %v84 = vshrl.u32 %v83, 7
    %v85 = vsub.s32 0, %v84
    %v86 = vrot.slane %v69, %v85
    %v87 = vlaneseq
    %v88 = vshrl.u32 %v87, 7
    %v89 = vsub.s32 0, %v88
    %v90 = vrot.slane %v52, %v89
    %v91 = vlaneseq
    %v92 = vshrl.u32 %v91, 7
    %v93 = vsub.s32 0, %v92
    %v94 = vrot.slane %v66, %v93
    %v95 = vlaneseq
    %v96 = vshrl.u32 %v95, 7
    %v97 = vsub.s32 0, %v96
    %v98 = vrot.slane %v68, %v97
    %v99 = vlaneseq
    %v100 = vshrl.u32 %v99, 7
    %v101 = vsub.s32 0, %v100
    %v102 = vrot.slane %v70, %v101
    %v111 = vadd.f32 %v12, %v74
    %v112 = vadd.f32 %v13, %v78
    %v113 = vadd.f32 %v14, %v82
    %v114 = vadd.f32 %v15, %v86
    %v115 = vadd.f32 %v16, %v90
    %v116 = vadd.f32 %v17, %v94
    %v117 = vadd.f32 %v18, %v98
    %v118 = vadd.f32 %v19, %v102
    %vm119 = vcmask 254976
    %120 = vst.msk [vmem:[#allocation2] sm:$0x3] %vm119, %v111
    %121 = vst.msk [vmem:[#allocation2 + $0x2] sm:$0x3] %vm119, %v112
    %122 = vst.msk [vmem:[#allocation2 + $0x4] sm:$0x3] %vm119, %v113
    %123 = vst.msk [vmem:[#allocation2 + $0x6] sm:$0x3] %vm119, %v114
    %124 = vst.msk [vmem:[#allocation2 + $0x8] sm:$0x3] %vm119, %v115
    %125 = vst.msk [vmem:[#allocation2 + $0xa] sm:$0x3] %vm119, %v116
    %126 = vst.msk [vmem:[#allocation2 + $0xc] sm:$0x3] %vm119, %v117
    %127 = vst.msk [vmem:[#allocation2 + $0xe] sm:$0x3] %vm119, %v118
    // Predicated region
    $region10: #{positional_encoding.1} parent=1 // pred_check
      _
    $region11: #{positional_encoding.1} parent=1 // pred_check_branch
      %129 = sbr.rel (0) target = $region13
    $region12: #{positional_encoding.1} parent=1 // pred_region
      %s131 = ssub.s32 256, 256
      %132 = vsyncadd [#allocation3], %s131
      %s133 = sshll.u32 [#allocation2], 4
      %s134 = int_to_ptr.vmem [resolvable:$true] %s133
      %139 = dma.vmem_to_hbm [thread:$0]  %s134, 256, %s2, [#allocation3], 32, 32, 2
    $region13: #{positional_encoding.1} parent=1 // pred_fallthru
      _
    // Predicated region
    $region14: #{positional_encoding.1} parent=1 // pred_check
      _
    $region15: #{positional_encoding.1} parent=1 // pred_check_branch
      %141 = sbr.rel (0) target = $region17
    $region16: #{positional_encoding.1} parent=1 // pred_region
      %142 = dma.done [#allocation3], 256
    $region17: #{positional_encoding.1} parent=1 // pred_fallthru
      _
    %143 = vsyncpa [#allocation3], 1

</llo_original>
